<compile_context>
chip_gen: v6e
topology: v6e:2x2x1
jax: 0.10.0
libtpu: 0.0.40
codegen_flags: <defaults>
</compile_context>

<pallas_src>
import math

import jax
import jax.numpy as jnp
from jax.experimental import pallas as pl
from jax.experimental.pallas import tpu as pltpu


def _erf_approx(x):
    # Abramowitz & Stegun 7.1.26 rational approximation of erf (max abs err ~1.5e-7), built only
    # from ops with guaranteed Mosaic lowering (exp/abs/mul/add/where/reciprocal).
    # TODO(synk): lax.erf has no guaranteed Pallas-TPU lowering; exact erf-GELU is reproduced to
    # float32 precision via this approximation.
    a1, a2, a3, a4, a5 = (0.254829592, -0.284496736, 1.421413741,
                          -1.453152027, 1.061405429)
    p = 0.3275911
    sign = jnp.where(x >= 0.0, 1.0, -1.0)
    ax = jnp.abs(x)
    y = 1.0 + p * ax
    # EUP approximate reciprocal + one Newton-Raphson refinement: keeps <= ~1e-7 relative error
    # while moving the long VPU divide sequence off the serial critical path.
    r = pl.reciprocal(y, approx=True)
    t = r * (2.0 - y * r)
    poly = ((((a5 * t + a4) * t + a3) * t + a2) * t + a1) * t
    return sign * (1.0 - poly * jnp.exp(-ax * ax))


def _gelu_exact(x):
    # PyTorch nn.GELU() default: x * 0.5 * (1 + erf(x / sqrt(2)))
    return 0.5 * x * (1.0 + _erf_approx(x * 0.7071067811865476))


def _fused_kernel(x_ref, w_ref, b_ref, means_ref, var_ref):
    """Grid-free kernel: all N element-MLPs (block-diag) + folded var MLP, all in VMEM."""
    NF = x_ref.shape[1]
    F = var_ref.shape[1]

    x = x_ref[...]                                   # (1, NF) flat input row
    b = b_ref[...]                                   # (4, NF) coalesced biases
    b1, b2, bv1f, bv2 = b[0:1], b[1:2], b[2:3], b[3:4]

    # --- all N element-MLP fc1's: one block-diagonal matmul ---
    h1 = _gelu_exact(
        jnp.dot(x, w_ref[0:NF, :], preferred_element_type=jnp.float32) + b1)

    # --- means = block-diagonal fc2 (off the var critical path) ---
    means = jnp.dot(h1, w_ref[NF:2 * NF, :], preferred_element_type=jnp.float32) + b2
    means_ref[...] = means.astype(means_ref.dtype)   # lane-dense (1, NF)

    # --- var hidden layer with fc2 pre-folded: hv = x@kx + h1@(W2bd@km) + (bv1 + b2@km) ---
    hv = (jnp.dot(x, w_ref[2 * NF:3 * NF, :], preferred_element_type=jnp.float32)
          + jnp.dot(h1, w_ref[3 * NF:4 * NF, :], preferred_element_type=jnp.float32)
          + bv1f)
    gv = _gelu_exact(hv)

    # --- var output layer (kv2 zero-padded to NF cols at pack time; first F lanes are var) ---
    var_full = jnp.dot(gv, w_ref[4 * NF:5 * NF, :],
                       preferred_element_type=jnp.float32) + bv2
    var_ref[...] = var_full[:, :F].astype(var_ref.dtype)


def init_params(key, frame_size, n_elements):
    """Deterministic PyTorch-style (uniform +/- 1/sqrt(fan_in)) init (torch layout)."""
    F, N = frame_size, n_elements

    def linear(k, fan_in, fan_out):
        k1, k2 = jax.random.split(k)
        bound = 1.0 / math.sqrt(fan_in)
        w = jax.random.uniform(k1, (fan_out, fan_in), jnp.float32, -bound, bound)
        b = jax.random.uniform(k2, (fan_out,), jnp.float32, -bound, bound)
        return w, b

    keys = jax.random.split(key, 2 * N + 2)
    w1s, b1s, w2s, b2s = [], [], [], []
    for i in range(N):
        w1, b1 = linear(keys[2 * i], F, F)
        w2, b2 = linear(keys[2 * i + 1], F, F)
        w1s.append(w1); b1s.append(b1); w2s.append(w2); b2s.append(b2)

    params = {
        "fc_w1T": jnp.stack([w.T for w in w1s]),   # (N, F, F)  (in, out)
        "fc_b1":  jnp.stack(b1s)[:, None, :],      # (N, 1, F)
        "fc_w2T": jnp.stack([w.T for w in w2s]),   # (N, F, F)
        "fc_b2":  jnp.stack(b2s)[:, None, :],      # (N, 1, F)
    }
    wv1, bv1 = linear(keys[2 * N], 2 * N, N)       # Linear(2N -> N)
    wv2, bv2 = linear(keys[2 * N + 1], N, 1)       # Linear(N -> 1)
    params["var_w1T"] = wv1.T                      # (2N, N)
    params["var_b1"] = bv1[None, :]                # (1, N)
    params["var_w2T"] = wv2.T                      # (N, 1)
    params["var_b2"] = bv2[None, :]                # (1, 1)
    return params


def pack_params(params, frame_size, n_elements):
    """One-time repack: block-diag element MLPs, Kronecker-expanded + pre-folded var weights,
    all coalesced into a single weight slab and a single bias slab (3 DMAs total with x)."""
    F, N = frame_size, n_elements
    NF = N * F
    eye = jnp.eye(F, dtype=jnp.float32)
    hp = jax.lax.Precision.HIGHEST   # pack-time folds done at full f32 precision

    def block_diag(blocks):                        # (N, F, F) -> (NF, NF)
        out = jnp.zeros((NF, NF), jnp.float32)
        for i in range(N):
            out = out.at[i * F:(i + 1) * F, i * F:(i + 1) * F].set(blocks[i])
        return out

    w1bd = block_diag(params["fc_w1T"])                      # (NF, NF)
    w2bd = block_diag(params["fc_w2T"])                      # (NF, NF)
    b1 = params["fc_b1"].reshape(1, NF)                      # (1, NF)
    b2 = params["fc_b2"].reshape(1, NF)                      # (1, NF)

    # var Linear(2N->N) split into x-half / means-half, Kronecker-expanded so the matmul acts
    # directly on flat (1, NF) rows:  K = kron(W_half^T, I_F).
    kx = jnp.kron(params["var_w1T"][:N, :], eye)             # (NF, NF)
    km = jnp.kron(params["var_w1T"][N:, :], eye)             # (NF, NF)
    bv1 = jnp.repeat(params["var_b1"], F, axis=1)            # (1, NF), [0, j*F+f] = bv1[j]

    # Pre-fold fc2 into the var branch (removes one MXU op from the serial critical path):
    #   means @ km = (h1 @ W2bd + b2) @ km = h1 @ (W2bd @ km) + b2 @ km
    w2km = jnp.dot(w2bd, km, precision=hp)                   # (NF, NF)
    bv1f = bv1 + jnp.dot(b2, km, precision=hp)               # (1, NF)

    # var Linear(N->1), expanded to act on flat rows; zero-padded to NF columns so it stacks
    # into the weight slab (only the first F output lanes are meaningful).
    kv2 = jnp.kron(params["var_w2T"], eye)                   # (NF, F)
    kv2_pad = jnp.zeros((NF, NF), jnp.float32).at[:, :F].set(kv2)
    bv2_row = jnp.tile(params["var_b2"], (1, NF))            # (1, NF)

    return {
        "W": jnp.concatenate([w1bd, w2bd, kx, w2km, kv2_pad], axis=0),  # (5*NF, NF)
        "B": jnp.concatenate([b1, b2, bv1f, bv2_row], axis=0),          # (4, NF)
    }


@jax.jit
def multi_gaussian_forward(packed, inputs):
    x = inputs[0] if inputs.ndim == 3 else inputs            # (N, F)
    N, F = x.shape
    NF = N * F
    x_flat = x.reshape(1, NF)                                # contiguous -> free reshape

    vmem = pl.BlockSpec(memory_space=pltpu.MemorySpace.VMEM)
    means_flat, var_row = pl.pallas_call(
        _fused_kernel,
        out_shape=(jax.ShapeDtypeStruct((1, NF), jnp.float32),
                   jax.ShapeDtypeStruct((1, F), jnp.float32)),
        in_specs=[vmem, vmem, vmem],                         # x, weight slab, bias slab
        out_specs=(vmem, vmem),
    )(x_flat, packed["W"], packed["B"])

    means = means_flat.reshape(N, F)                         # == torch.cat(means, 0)
    var = var_row.reshape(F, 1)                              # row vector -> (F, 1)
    return means, var


def reference_forward(params, inputs):
    """Pure-JAX reference (exact erf-GELU, unpacked torch-layout weights)."""
    x = inputs[0] if inputs.ndim == 3 else inputs
    gelu = lambda z: jax.nn.gelu(z, approximate=False)
    N = params["fc_w1T"].shape[0]
    means = []
    for i in range(N):
        h = gelu(x[i:i + 1] @ params["fc_w1T"][i] + params["fc_b1"][i])
        means.append(h @ params["fc_w2T"][i] + params["fc_b2"][i])
    means = jnp.concatenate(means, axis=0)
    v = jnp.concatenate([x, means], axis=0).T
    h = gelu(v @ params["var_w1T"] + params["var_b1"])
    var = h @ params["var_w2T"] + params["var_b2"]
    return means, var


if __name__ == "__main__":
    FRAME_SIZE = 16    # frame_size
    N_ELEMENTS = 4     # n_elements

    key = jax.random.PRNGKey(0)
    pkey, xkey = jax.random.split(key)
    params = init_params(pkey, FRAME_SIZE, N_ELEMENTS)
    packed = pack_params(params, FRAME_SIZE, N_ELEMENTS)
    inputs = jax.random.normal(xkey, (1, N_ELEMENTS, FRAME_SIZE), jnp.float32)

    means, var = multi_gaussian_forward(packed, inputs)
    means = jax.block_until_ready(means)
    var = jax.block_until_ready(var)

    ref_means, ref_var = reference_forward(params, inputs)
    assert means.shape == (N_ELEMENTS, FRAME_SIZE), means.shape
    assert var.shape == (FRAME_SIZE, 1), var.shape
    assert jnp.allclose(means, ref_means, atol=1e-3, rtol=1e-3)
    assert jnp.allclose(var, ref_var, atol=1e-3, rtol=1e-3)
    print("KERNEL_OK")
</pallas_src>

<mosaic_0001>
module attributes {stable_mosaic.version = 11 : i64} {
  func.func @_fused_kernel(%arg0: memref<1x64xf32, #tpu.memory_space<vmem>>, %arg1: memref<320x64xf32, #tpu.memory_space<vmem>>, %arg2: memref<4x64xf32, #tpu.memory_space<vmem>>, %arg3: memref<1x64xf32, #tpu.memory_space<vmem>>, %arg4: memref<1x16xf32, #tpu.memory_space<vmem>>) attributes {dimension_semantics = [], scalar_prefetch = 0 : i64, scratch_operands = 0 : i64, tpu.core_type = #tpu.core_type<tc>} {
    %c0 = arith.constant 0 : index
    %c0_0 = arith.constant 0 : index
    %0 = vector.load %arg0[%c0, %c0_0] : memref<1x64xf32, #tpu.memory_space<vmem>>, vector<1x64xf32>
    %c0_1 = arith.constant 0 : index
    %c0_2 = arith.constant 0 : index
    %1 = vector.load %arg2[%c0_1, %c0_2] : memref<4x64xf32, #tpu.memory_space<vmem>>, vector<4x64xf32>
    %2 = vector.extract_strided_slice %1 {offsets = [0, 0], sizes = [1, 64], strides = [1, 1]} : vector<4x64xf32> to vector<1x64xf32>
    %3 = vector.extract_strided_slice %1 {offsets = [1, 0], sizes = [1, 64], strides = [1, 1]} : vector<4x64xf32> to vector<1x64xf32>
    %4 = vector.extract_strided_slice %1 {offsets = [2, 0], sizes = [1, 64], strides = [1, 1]} : vector<4x64xf32> to vector<1x64xf32>
    %5 = vector.extract_strided_slice %1 {offsets = [3, 0], sizes = [1, 64], strides = [1, 1]} : vector<4x64xf32> to vector<1x64xf32>
    %c0_3 = arith.constant 0 : index
    %c0_4 = arith.constant 0 : index
    %6 = vector.load %arg1[%c0_3, %c0_4] : memref<320x64xf32, #tpu.memory_space<vmem>>, vector<64x64xf32>
    %cst = arith.constant dense<0.000000e+00> : vector<1x64xf32>
    %7 = tpu.matmul %0, %6, %cst {dimension_numbers = #tpu.dot_dimension_numbers<[1], [0], [0], [1], [0, 0, 1, 1], [], []>} : vector<1x64xf32>, vector<64x64xf32>, vector<1x64xf32> -> vector<1x64xf32>
    %8 = arith.addf %7, %2 : vector<1x64xf32>
    %cst_5 = arith.constant 5.000000e-01 : f32
    %9 = vector.broadcast %cst_5 : f32 to vector<1x64xf32>
    %10 = arith.mulf %9, %8 : vector<1x64xf32>
    %cst_6 = arith.constant 0.707106769 : f32
    %11 = vector.broadcast %cst_6 : f32 to vector<1x64xf32>
    %12 = arith.mulf %8, %11 : vector<1x64xf32>
    %cst_7 = arith.constant 0.000000e+00 : f32
    %13 = vector.broadcast %cst_7 : f32 to vector<1x64xf32>
    %14 = arith.cmpf oge, %12, %13 : vector<1x64xf32>
    %cst_8 = arith.constant 1.000000e+00 : f32
    %cst_9 = arith.constant -1.000000e+00 : f32
    %15 = vector.broadcast %cst_8 : f32 to vector<1x64xf32>
    %16 = vector.broadcast %cst_9 : f32 to vector<1x64xf32>
    %17 = arith.select %14, %15, %16 : vector<1x64xi1>, vector<1x64xf32>
    %18 = math.absf %12 : vector<1x64xf32>
    %cst_10 = arith.constant 0.327591091 : f32
    %19 = vector.broadcast %cst_10 : f32 to vector<1x64xf32>
    %20 = arith.mulf %19, %18 : vector<1x64xf32>
    %cst_11 = arith.constant 1.000000e+00 : f32
    %21 = vector.broadcast %cst_11 : f32 to vector<1x64xf32>
    %22 = arith.addf %21, %20 : vector<1x64xf32>
    %23 = tpu.reciprocal %22 {approx = true} : vector<1x64xf32> -> vector<1x64xf32>
    %24 = arith.mulf %22, %23 : vector<1x64xf32>
    %cst_12 = arith.constant 2.000000e+00 : f32
    %25 = vector.broadcast %cst_12 : f32 to vector<1x64xf32>
    %26 = arith.subf %25, %24 : vector<1x64xf32>
    %27 = arith.mulf %23, %26 : vector<1x64xf32>
    %cst_13 = arith.constant 1.06140542 : f32
    %28 = vector.broadcast %cst_13 : f32 to vector<1x64xf32>
    %29 = arith.mulf %28, %27 : vector<1x64xf32>
    %cst_14 = arith.constant -1.45315206 : f32
    %30 = vector.broadcast %cst_14 : f32 to vector<1x64xf32>
    %31 = arith.addf %29, %30 : vector<1x64xf32>
    %32 = arith.mulf %31, %27 : vector<1x64xf32>
    %cst_15 = arith.constant 1.42141378 : f32
    %33 = vector.broadcast %cst_15 : f32 to vector<1x64xf32>
    %34 = arith.addf %32, %33 : vector<1x64xf32>
    %35 = arith.mulf %34, %27 : vector<1x64xf32>
    %cst_16 = arith.constant -0.284496725 : f32
    %36 = vector.broadcast %cst_16 : f32 to vector<1x64xf32>
    %37 = arith.addf %35, %36 : vector<1x64xf32>
    %38 = arith.mulf %37, %27 : vector<1x64xf32>
    %cst_17 = arith.constant 0.254829586 : f32
    %39 = vector.broadcast %cst_17 : f32 to vector<1x64xf32>
    %40 = arith.addf %38, %39 : vector<1x64xf32>
    %41 = arith.mulf %40, %27 : vector<1x64xf32>
    %cst_18 = arith.constant 0.000000e+00 : f32
    %42 = vector.broadcast %cst_18 : f32 to vector<1x64xf32>
    %43 = arith.subf %42, %18 : vector<1x64xf32>
    %44 = arith.mulf %43, %18 : vector<1x64xf32>
    %45 = math.exp %44 : vector<1x64xf32>
    %46 = arith.mulf %41, %45 : vector<1x64xf32>
    %cst_19 = arith.constant 1.000000e+00 : f32
    %47 = vector.broadcast %cst_19 : f32 to vector<1x64xf32>
    %48 = arith.subf %47, %46 : vector<1x64xf32>
    %49 = arith.mulf %17, %48 : vector<1x64xf32>
    %cst_20 = arith.constant 1.000000e+00 : f32
    %50 = vector.broadcast %cst_20 : f32 to vector<1x64xf32>
    %51 = arith.addf %50, %49 : vector<1x64xf32>
    %52 = arith.mulf %10, %51 : vector<1x64xf32>
    %c64 = arith.constant 64 : index
    %c0_21 = arith.constant 0 : index
    %53 = vector.load %arg1[%c64, %c0_21] : memref<320x64xf32, #tpu.memory_space<vmem>>, vector<64x64xf32>
    %cst_22 = arith.constant dense<0.000000e+00> : vector<1x64xf32>
    %54 = tpu.matmul %52, %53, %cst_22 {dimension_numbers = #tpu.dot_dimension_numbers<[1], [0], [0], [1], [0, 0, 1, 1], [], []>} : vector<1x64xf32>, vector<64x64xf32>, vector<1x64xf32> -> vector<1x64xf32>
    %55 = arith.addf %54, %3 : vector<1x64xf32>
    %c0_23 = arith.constant 0 : index
    %c0_24 = arith.constant 0 : index
    %56 = vector.load %arg3[%c0_23, %c0_24] : memref<1x64xf32, #tpu.memory_space<vmem>>, vector<1x64xf32>
    tpu.vector_store %arg3[%c0_23, %c0_24], %55 {strides = array<i32>} : memref<1x64xf32, #tpu.memory_space<vmem>>, vector<1x64xf32>,
    %c128 = arith.constant 128 : index
    %c0_25 = arith.constant 0 : index
    %57 = vector.load %arg1[%c128, %c0_25] : memref<320x64xf32, #tpu.memory_space<vmem>>, vector<64x64xf32>
    %cst_26 = arith.constant dense<0.000000e+00> : vector<1x64xf32>
    %58 = tpu.matmul %0, %57, %cst_26 {dimension_numbers = #tpu.dot_dimension_numbers<[1], [0], [0], [1], [0, 0, 1, 1], [], []>} : vector<1x64xf32>, vector<64x64xf32>, vector<1x64xf32> -> vector<1x64xf32>
    %c192 = arith.constant 192 : index
    %c0_27 = arith.constant 0 : index
    %59 = vector.load %arg1[%c192, %c0_27] : memref<320x64xf32, #tpu.memory_space<vmem>>, vector<64x64xf32>
    %cst_28 = arith.constant dense<0.000000e+00> : vector<1x64xf32>
    %60 = tpu.matmul %52, %59, %cst_28 {dimension_numbers = #tpu.dot_dimension_numbers<[1], [0], [0], [1], [0, 0, 1, 1], [], []>} : vector<1x64xf32>, vector<64x64xf32>, vector<1x64xf32> -> vector<1x64xf32>
    %61 = arith.addf %58, %60 : vector<1x64xf32>
    %62 = arith.addf %61, %4 : vector<1x64xf32>
    %cst_29 = arith.constant 5.000000e-01 : f32
    %63 = vector.broadcast %cst_29 : f32 to vector<1x64xf32>
    %64 = arith.mulf %63, %62 : vector<1x64xf32>
    %cst_30 = arith.constant 0.707106769 : f32
    %65 = vector.broadcast %cst_30 : f32 to vector<1x64xf32>
    %66 = arith.mulf %62, %65 : vector<1x64xf32>
    %cst_31 = arith.constant 0.000000e+00 : f32
    %67 = vector.broadcast %cst_31 : f32 to vector<1x64xf32>
    %68 = arith.cmpf oge, %66, %67 : vector<1x64xf32>
    %cst_32 = arith.constant 1.000000e+00 : f32
    %cst_33 = arith.constant -1.000000e+00 : f32
    %69 = vector.broadcast %cst_32 : f32 to vector<1x64xf32>
    %70 = vector.broadcast %cst_33 : f32 to vector<1x64xf32>
    %71 = arith.select %68, %69, %70 : vector<1x64xi1>, vector<1x64xf32>
    %72 = math.absf %66 : vector<1x64xf32>
    %cst_34 = arith.constant 0.327591091 : f32
    %73 = vector.broadcast %cst_34 : f32 to vector<1x64xf32>
    %74 = arith.mulf %73, %72 : vector<1x64xf32>
    %cst_35 = arith.constant 1.000000e+00 : f32
    %75 = vector.broadcast %cst_35 : f32 to vector<1x64xf32>
    %76 = arith.addf %75, %74 : vector<1x64xf32>
    %77 = tpu.reciprocal %76 {approx = true} : vector<1x64xf32> -> vector<1x64xf32>
    %78 = arith.mulf %76, %77 : vector<1x64xf32>
    %cst_36 = arith.constant 2.000000e+00 : f32
    %79 = vector.broadcast %cst_36 : f32 to vector<1x64xf32>
    %80 = arith.subf %79, %78 : vector<1x64xf32>
    %81 = arith.mulf %77, %80 : vector<1x64xf32>
    %cst_37 = arith.constant 1.06140542 : f32
    %82 = vector.broadcast %cst_37 : f32 to vector<1x64xf32>
    %83 = arith.mulf %82, %81 : vector<1x64xf32>
    %cst_38 = arith.constant -1.45315206 : f32
    %84 = vector.broadcast %cst_38 : f32 to vector<1x64xf32>
    %85 = arith.addf %83, %84 : vector<1x64xf32>
    %86 = arith.mulf %85, %81 : vector<1x64xf32>
    %cst_39 = arith.constant 1.42141378 : f32
    %87 = vector.broadcast %cst_39 : f32 to vector<1x64xf32>
    %88 = arith.addf %86, %87 : vector<1x64xf32>
    %89 = arith.mulf %88, %81 : vector<1x64xf32>
    %cst_40 = arith.constant -0.284496725 : f32
    %90 = vector.broadcast %cst_40 : f32 to vector<1x64xf32>
    %91 = arith.addf %89, %90 : vector<1x64xf32>
    %92 = arith.mulf %91, %81 : vector<1x64xf32>
    %cst_41 = arith.constant 0.254829586 : f32
    %93 = vector.broadcast %cst_41 : f32 to vector<1x64xf32>
    %94 = arith.addf %92, %93 : vector<1x64xf32>
    %95 = arith.mulf %94, %81 : vector<1x64xf32>
    %cst_42 = arith.constant 0.000000e+00 : f32
    %96 = vector.broadcast %cst_42 : f32 to vector<1x64xf32>
    %97 = arith.subf %96, %72 : vector<1x64xf32>
    %98 = arith.mulf %97, %72 : vector<1x64xf32>
    %99 = math.exp %98 : vector<1x64xf32>
    %100 = arith.mulf %95, %99 : vector<1x64xf32>
    %cst_43 = arith.constant 1.000000e+00 : f32
    %101 = vector.broadcast %cst_43 : f32 to vector<1x64xf32>
    %102 = arith.subf %101, %100 : vector<1x64xf32>
    %103 = arith.mulf %71, %102 : vector<1x64xf32>
    %cst_44 = arith.constant 1.000000e+00 : f32
    %104 = vector.broadcast %cst_44 : f32 to vector<1x64xf32>
    %105 = arith.addf %104, %103 : vector<1x64xf32>
    %106 = arith.mulf %64, %105 : vector<1x64xf32>
    %c256 = arith.constant 256 : index
    %c0_45 = arith.constant 0 : index
    %107 = vector.load %arg1[%c256, %c0_45] : memref<320x64xf32, #tpu.memory_space<vmem>>, vector<64x64xf32>
    %cst_46 = arith.constant dense<0.000000e+00> : vector<1x64xf32>
    %108 = tpu.matmul %106, %107, %cst_46 {dimension_numbers = #tpu.dot_dimension_numbers<[1], [0], [0], [1], [0, 0, 1, 1], [], []>} : vector<1x64xf32>, vector<64x64xf32>, vector<1x64xf32> -> vector<1x64xf32>
    %109 = arith.addf %108, %5 : vector<1x64xf32>
    %110 = vector.extract_strided_slice %109 {offsets = [0, 0], sizes = [1, 16], strides = [1, 1]} : vector<1x64xf32> to vector<1x16xf32>
    %c0_47 = arith.constant 0 : index
    %c0_48 = arith.constant 0 : index
    %111 = vector.load %arg4[%c0_47, %c0_48] : memref<1x16xf32, #tpu.memory_space<vmem>>, vector<1x16xf32>
    tpu.vector_store %arg4[%c0_47, %c0_48], %110 {strides = array<i32>} : memref<1x16xf32, #tpu.memory_space<vmem>>, vector<1x16xf32>,
    return
  }
}

</mosaic_0001>

<llo_original>
// kernel: squeeze.1
$region0: #{squeeze.1}
  %s0 = inlined_call_operand.vmem [shape: f32[1,4,16], index: 0, kind: input, shape index: {}]
  %s1 = inlined_call_operand.vmem [shape: f32[1,64], index: 1, kind: output, shape index: {}]
  $region1: #{squeeze.1} parent=0
    #allocation0 [shape = 'u8[4096]{0}', space=vmem, size = 0x1000, scoped, tag = 'scoped mem for output reshape']
    #allocation1 [shape = 'u8[4096]{0}', space=vmem, size = 0x1000, scoped, tag = 'scoped mem for input reshape']
    %s3 = sshll.u32 1, 4
    %s4 = ssub.s32 %s3, 1
    %v5 = vld [vmem:[%s0] sm:%s4]
    %6 = vst [vmem:[#allocation1] sm:%s4] %v5
    %v7 = vld [vmem:[#allocation1] sm:$0x1]
    %vm8 = vcmask 130048
    %9 = vst.msk [vmem:[#allocation0] sm:$0x1] %vm8, %v7
    %s10 = scalar_lea.vmem [#allocation1], 3
    %v11 = vld [vmem:[%s10] sm:$0x1]
    %12 = vrot.lane.b32.xlu0 %v11, 48
    %v13 = vpop.permute.xlu0 %12
    %vm14 = vcmask 523648
    %15 = vst.msk [vmem:[#allocation0] sm:$0x1] %vm14, %v13
    %s16 = scalar_lea.vmem [#allocation1], 2
    %v17 = vld [vmem:[%s16] sm:$0x1]
    %18 = vrot.lane.b32.xlu0 %v17, 32
    %v19 = vpop.permute.xlu0 %18
    %vm20 = vcmask 392448
    %21 = vst.msk [vmem:[#allocation0] sm:$0x1] %vm20, %v19
    %s22 = scalar_lea.vmem [#allocation1], 1
    %v23 = vld [vmem:[%s22] sm:$0x1]
    %24 = vrot.lane.b32.xlu0 %v23, 16
    %v25 = vpop.permute.xlu0 %24
    %vm26 = vcmask 261248
    %27 = vst.msk [vmem:[#allocation0] sm:$0x1] %vm26, %v25
    %s29 = sshll.u32 1, 1
    %s30 = ssub.s32 %s29, 1
    %v32 = vld [vmem:[#allocation0] sm:%s30]
    %s33 = sshll.u32 1, 1
    %s34 = ssub.s32 %s33, 1
    %35 = vst [vmem:[%s1] sm:%s34] %v32

// kernel: multi_gaussian_forward.1
$region0: #{multi_gaussian_forward.1}
  #allocation0 [shape = 'u32[]', space=smem, size = 0x4, offset = 0x4, fixed_abs, tag = 'smem constant byte address 0x4 - core index']
  #allocation1 [shape = 'u32[144,128]{1,0:T(1,128)}', space=vmem, size = 0x12000, scoped, tag = 'internal scratch']
  %s0 = inlined_call_operand.vmem [shape: f32[1,64], index: 0, kind: input, shape index: {}]
  %s1 = inlined_call_operand.vmem [shape: f32[320,64], index: 1, kind: input, shape index: {}]
  %s2 = inlined_call_operand.vmem [shape: f32[4,64], index: 2, kind: input, shape index: {}]
  %s3 = inlined_call_operand.vmem [shape: f32[1,64], index: 3, kind: output, shape index: {0}]
  %s4 = inlined_call_operand.hbm [shape: f32[1,16], index: 4, kind: output, shape index: {1}]
  %5 = xla_tuple %s3, %s4
  %s6 = sld [smem:[#allocation0]]
  $region30: #{multi_gaussian_forward.1} parent=0
    _
  %s8 = ssub.s32 1, %s6
  %s9 = scalar_select 0, %s8, %s6
  $region1: #{multi_gaussian_forward.1} parent=0
    #allocation2 [shape = 'u8[512]{0}', space=vmem, size = 0x400, scoped, tag = 'output window, operand 1, single buffered']
    #allocation3 [shape = 's32[1]{0}', space=sflag, size = 0x4, scoped, tag = 'scoped memory for multi_gaussian_forward.1']
    %10 = vsyncpa [#allocation3], 0
    // Predicated region
    $region2: #{multi_gaussian_forward.1} parent=1 // pred_check
      _
    $region3: #{multi_gaussian_forward.1} parent=1 // pred_check_branch
      %12 = sbr.rel (0) target = $region5
    $region4: #{multi_gaussian_forward.1} parent=1 // pred_region
      _
    $region5: #{multi_gaussian_forward.1} parent=1 // pred_fallthru
      _
    // Predicated region
    $region6: #{multi_gaussian_forward.1} parent=1 // pred_check
      _
    $region7: #{multi_gaussian_forward.1} parent=1 // pred_check_branch
      %14 = sbr.rel (0) target = $region9
    $region8: #{multi_gaussian_forward.1} parent=1 // pred_region
      _
    $region9: #{multi_gaussian_forward.1} parent=1 // pred_fallthru
      _
    // Predicated region
    $region10: #{multi_gaussian_forward.1} parent=1 // pred_check
      _
    $region11: #{multi_gaussian_forward.1} parent=1 // pred_check_branch
      %16 = sbr.rel (0) target = $region13
    $region12: #{multi_gaussian_forward.1} parent=1 // pred_region
      _
    $region13: #{multi_gaussian_forward.1} parent=1 // pred_fallthru
      _
    %v17 = vld [vmem:[%s0] sm:$0x1]
    %v18 = vld [vmem:[%s2] sm:$0xf]
    %v19 = vld [vmem:[%s1] sm:$0xff]
    %v20 = vld [vmem:[%s1 + $0x8] sm:$0xff]
    %v21 = vld [vmem:[%s1 + $0x10] sm:$0xff]
    %v22 = vld [vmem:[%s1 + $0x18] sm:$0xff]
    %v23 = vld [vmem:[%s1 + $0x20] sm:$0xff]
    %v24 = vld [vmem:[%s1 + $0x28] sm:$0xff]
    %v25 = vld [vmem:[%s1 + $0x30] sm:$0xff]
    %v26 = vld [vmem:[%s1 + $0x38] sm:$0xff]
    %vm27 = vcmask 523264
    %v29 = vsel %vm27, %v17, 0
    %31 = vmatprep.subr.mxu0 0.0
    %32 = vmatpush1.msra.mxu0 0.0
    %33 = vmatprep.subr.mxu0 0.0
    %34 = vmatpush1.msra.mxu0 0.0
    %35 = vmatprep.subr.mxu0 0.0
    %36 = vmatpush1.msra.mxu0 0.0
    %37 = vmatprep.subr.mxu0 0.0
    %38 = vmatpush1.msra.mxu0 0.0
    %39 = vmatprep.subr.mxu0 0.0
    %40 = vmatpush1.msra.mxu0 0.0
    %41 = vmatprep.subr.mxu0 0.0
    %42 = vmatpush1.msra.mxu0 0.0
    %43 = vmatprep.subr.mxu0 0.0
    %44 = vmatpush1.msra.mxu0 0.0
    %45 = vmatprep.subr.mxu0 0.0
    %46 = vmatpush1.msra.mxu0 0.0
    %47 = vmatprep.subr.mxu0 0.0
    %48 = vmatpush1.msra.mxu0 %v26
    %49 = vmatprep.subr.mxu0 0.0
    %50 = vmatpush1.msra.mxu0 %v25
    %51 = vmatprep.subr.mxu0 0.0
    %52 = vmatpush1.msra.mxu0 %v24
    %53 = vmatprep.subr.mxu0 0.0
    %54 = vmatpush1.msra.mxu0 %v23
    %55 = vmatprep.subr.mxu0 0.0
    %56 = vmatpush1.msra.mxu0 %v22
    %57 = vmatprep.subr.mxu0 0.0
    %58 = vmatpush1.msra.mxu0 %v21
    %59 = vmatprep.subr.mxu0 0.0
    %60 = vmatpush1.msra.mxu0 %v20
    %61 = vmatprep.subr.mxu0 0.0
    %62 = vmatpush1.msra.mxu0 %v19
    %63 = vmatprep.subr.mxu0 0.0
    %64 = vmatpush2.msra.mxu0 0.0
    %65 = vmatprep.subr.mxu0 0.0
    %66 = vmatpush2.msra.mxu0 0.0
    %67 = vmatprep.subr.mxu0 0.0
    %68 = vmatpush2.msra.mxu0 0.0
    %69 = vmatprep.subr.mxu0 0.0
    %70 = vmatpush2.msra.mxu0 0.0
    %71 = vmatprep.subr.mxu0 0.0
    %72 = vmatpush2.msra.mxu0 0.0
    %73 = vmatprep.subr.mxu0 0.0
    %74 = vmatpush2.msra.mxu0 0.0
    %75 = vmatprep.subr.mxu0 0.0
    %76 = vmatpush2.msra.mxu0 0.0
    %77 = vmatprep.subr.mxu0 0.0
    %78 = vmatpush2.msra.mxu0 0.0
    %79 = vmatprep.subr.mxu0 0.0
    %80 = vmatpush2.msra.mxu0 0.0
    %81 = vmatprep.subr.mxu0 0.0
    %82 = vmatpush2.msra.mxu0 0.0
    %83 = vmatprep.subr.mxu0 0.0
    %84 = vmatpush2.msra.mxu0 0.0
    %85 = vmatprep.subr.mxu0 0.0
    %86 = vmatpush2.msra.mxu0 0.0
    %87 = vmatprep.subr.mxu0 0.0
    %88 = vmatpush2.msra.mxu0 0.0
    %89 = vmatprep.subr.mxu0 0.0
    %90 = vmatpush2.msra.mxu0 0.0
    %91 = vmatprep.subr.mxu0 0.0
    %92 = vmatpush2.msra.mxu0 0.0
    %93 = vmatprep.subr.mxu0 0.0
    %94 = vmatpush2.msra.mxu0 0.0
    %95 = vmatprep.mubr.f32.mxu0 0.0
    %96 = vmatmul.mubr.f32.gmra.mxu0 %v29
    %v97 = vpop.f32.mrf.mxu0
    %v98 = vadd.f32 %v18, %v97
    %v99 = vpop.f32.mrf.mxu0
    %100 = vdwg.mxu0
    %v101 = vmul.f32 %v98, 0.5
    %v102 = vmul.f32 %v98, 0.70710677
    %vm103 = vcmp.ge.f32.partialorder %v102, 0.0
    %v104 = vsel %vm103, 1.0, -1.0
    %v105 = vand.u32 2147483647, %v102
    %v106 = vmul.f32 %v105, 0.3275911
    %v107 = vadd.f32 %v106, 1.0
    %v108 = vrcp.pop %v107
    %v109 = vmul.f32 %v107, %v108
    %v110 = vsub.f32 2.0, %v109
    %v111 = vmul.f32 %v108, %v110
    %v112 = vmul.f32 %v111, 1.0614054
    %v113 = vadd.f32 %v112, -1.4531521
    %v114 = vmul.f32 %v113, %v111
    %v115 = vadd.f32 %v114, 1.4214138
    %v116 = vmul.f32 %v115, %v111
    %v117 = vadd.f32 %v116, -0.28449672
    %v118 = vmul.f32 %v117, %v111
    %v119 = vadd.f32 %v118, 0.2548296
    %v120 = vmul.f32 %v119, %v111
    %v121 = vsub.f32 0.0, %v105
    %v122 = vmul.f32 %v121, %v105
    %v123 = vmul.f32 %v122, 1.442695
    %v124 = vpow.pop %v123
    %v125 = vmul.f32 %v120, %v124
    %v126 = vsub.f32 1.0, %v125
    %v127 = vmul.f32 %v104, %v126
    %v128 = vadd.f32 %v127, 1.0
    %v129 = vmul.f32 %v101, %v128
    %v130 = vld [vmem:[%s1 + $0x40] sm:$0xff]
    %v131 = vld [vmem:[%s1 + $0x48] sm:$0xff]
    %v132 = vld [vmem:[%s1 + $0x50] sm:$0xff]
    %v133 = vld [vmem:[%s1 + $0x58] sm:$0xff]
    %v134 = vld [vmem:[%s1 + $0x60] sm:$0xff]
    %v135 = vld [vmem:[%s1 + $0x68] sm:$0xff]
    %v136 = vld [vmem:[%s1 + $0x70] sm:$0xff]
    %v137 = vld [vmem:[%s1 + $0x78] sm:$0xff]
    %v139 = vrot.slane %v18, 1
    %v142 = vsel %vm27, %v129, 0
    %144 = vmatprep.subr.mxu0 0.0
    %145 = vmatpush1.msra.mxu0 0.0
    %146 = vmatprep.subr.mxu0 0.0
    %147 = vmatpush1.msra.mxu0 0.0
    %148 = vmatprep.subr.mxu0 0.0
    %149 = vmatpush1.msra.mxu0 0.0
    %150 = vmatprep.subr.mxu0 0.0
    %151 = vmatpush1.msra.mxu0 0.0
    %152 = vmatprep.subr.mxu0 0.0
    %153 = vmatpush1.msra.mxu0 0.0
    %154 = vmatprep.subr.mxu0 0.0
    %155 = vmatpush1.msra.mxu0 0.0
    %156 = vmatprep.subr.mxu0 0.0
    %157 = vmatpush1.msra.mxu0 0.0
    %158 = vmatprep.subr.mxu0 0.0
    %159 = vmatpush1.msra.mxu0 0.0
    %160 = vmatprep.subr.mxu0 0.0
    %161 = vmatpush1.msra.mxu0 %v137
    %162 = vmatprep.subr.mxu0 0.0
    %163 = vmatpush1.msra.mxu0 %v136
    %164 = vmatprep.subr.mxu0 0.0
    %165 = vmatpush1.msra.mxu0 %v135
    %166 = vmatprep.subr.mxu0 0.0
    %167 = vmatpush1.msra.mxu0 %v134
    %168 = vmatprep.subr.mxu0 0.0
    %169 = vmatpush1.msra.mxu0 %v133
    %170 = vmatprep.subr.mxu0 0.0
    %171 = vmatpush1.msra.mxu0 %v132
    %172 = vmatprep.subr.mxu0 0.0
    %173 = vmatpush1.msra.mxu0 %v131
    %174 = vmatprep.subr.mxu0 0.0
    %175 = vmatpush1.msra.mxu0 %v130
    %176 = vmatprep.subr.mxu0 0.0
    %177 = vmatpush2.msra.mxu0 0.0
    %178 = vmatprep.subr.mxu0 0.0
    %179 = vmatpush2.msra.mxu0 0.0
    %180 = vmatprep.subr.mxu0 0.0
    %181 = vmatpush2.msra.mxu0 0.0
    %182 = vmatprep.subr.mxu0 0.0
    %183 = vmatpush2.msra.mxu0 0.0
    %184 = vmatprep.subr.mxu0 0.0
    %185 = vmatpush2.msra.mxu0 0.0
    %186 = vmatprep.subr.mxu0 0.0
    %187 = vmatpush2.msra.mxu0 0.0
    %188 = vmatprep.subr.mxu0 0.0
    %189 = vmatpush2.msra.mxu0 0.0
    %190 = vmatprep.subr.mxu0 0.0
    %191 = vmatpush2.msra.mxu0 0.0
    %192 = vmatprep.subr.mxu0 0.0
    %193 = vmatpush2.msra.mxu0 0.0
    %194 = vmatprep.subr.mxu0 0.0
    %195 = vmatpush2.msra.mxu0 0.0
    %196 = vmatprep.subr.mxu0 0.0
    %197 = vmatpush2.msra.mxu0 0.0
    %198 = vmatprep.subr.mxu0 0.0
    %199 = vmatpush2.msra.mxu0 0.0
    %200 = vmatprep.subr.mxu0 0.0
    %201 = vmatpush2.msra.mxu0 0.0
    %202 = vmatprep.subr.mxu0 0.0
    %203 = vmatpush2.msra.mxu0 0.0
    %204 = vmatprep.subr.mxu0 0.0
    %205 = vmatpush2.msra.mxu0 0.0
    %206 = vmatprep.subr.mxu0 0.0
    %207 = vmatpush2.msra.mxu0 0.0
    %208 = vmatprep.mubr.f32.mxu0 0.0
    %209 = vmatmul.mubr.f32.gmra.mxu0 %v142
    %v210 = vpop.f32.mrf.mxu0
    %v211 = vadd.f32 %v139, %v210
    %v212 = vpop.f32.mrf.mxu0
    %213 = vdwg.mxu0
    %vm214 = vcmask 516096
    %215 = vst.msk [vmem:[%s3] sm:$0x1] %vm214, %v211
    %v216 = vld [vmem:[%s1 + $0x80] sm:$0xff]
    %v217 = vld [vmem:[%s1 + $0x88] sm:$0xff]
    %v218 = vld [vmem:[%s1 + $0x90] sm:$0xff]
    %v219 = vld [vmem:[%s1 + $0x98] sm:$0xff]
    %v220 = vld [vmem:[%s1 + $0xa0] sm:$0xff]
    %v221 = vld [vmem:[%s1 + $0xa8] sm:$0xff]
    %v222 = vld [vmem:[%s1 + $0xb0] sm:$0xff]
    %v223 = vld [vmem:[%s1 + $0xb8] sm:$0xff]
    %v224 = vld [vmem:[%s1 + $0xc0] sm:$0xff]
    %v225 = vld [vmem:[%s1 + $0xc8] sm:$0xff]
    %v226 = vld [vmem:[%s1 + $0xd0] sm:$0xff]
    %v227 = vld [vmem:[%s1 + $0xd8] sm:$0xff]
    %v228 = vld [vmem:[%s1 + $0xe0] sm:$0xff]
    %v229 = vld [vmem:[%s1 + $0xe8] sm:$0xff]
    %v230 = vld [vmem:[%s1 + $0xf0] sm:$0xff]
    %v231 = vld [vmem:[%s1 + $0xf8] sm:$0xff]
    %232 = vmatprep.subr.mxu0 0.0
    %233 = vmatpush1.msra.mxu0 0.0
    %234 = vmatprep.subr.mxu0 0.0
    %235 = vmatpush1.msra.mxu0 0.0
    %236 = vmatprep.subr.mxu0 0.0
    %237 = vmatpush1.msra.mxu0 0.0
    %238 = vmatprep.subr.mxu0 0.0
    %239 = vmatpush1.msra.mxu0 0.0
    %240 = vmatprep.subr.mxu0 0.0
    %241 = vmatpush1.msra.mxu0 0.0
    %242 = vmatprep.subr.mxu0 0.0
    %243 = vmatpush1.msra.mxu0 0.0
    %244 = vmatprep.subr.mxu0 0.0
    %245 = vmatpush1.msra.mxu0 0.0
    %246 = vmatprep.subr.mxu0 0.0
    %247 = vmatpush1.msra.mxu0 0.0
    %248 = vmatprep.subr.mxu0 0.0
    %249 = vmatpush1.msra.mxu0 %v231
    %250 = vmatprep.subr.mxu0 0.0
    %251 = vmatpush1.msra.mxu0 %v230
    %252 = vmatprep.subr.mxu0 0.0
    %253 = vmatpush1.msra.mxu0 %v229
    %254 = vmatprep.subr.mxu0 0.0
    %255 = vmatpush1.msra.mxu0 %v228
    %256 = vmatprep.subr.mxu0 0.0
    %257 = vmatpush1.msra.mxu0 %v227
    %258 = vmatprep.subr.mxu0 0.0
    %259 = vmatpush1.msra.mxu0 %v226
    %260 = vmatprep.subr.mxu0 0.0
    %261 = vmatpush1.msra.mxu0 %v225
    %262 = vmatprep.subr.mxu0 0.0
    %263 = vmatpush1.msra.mxu0 %v224
    %264 = vmatprep.subr.mxu0 0.0
    %265 = vmatpush2.msra.mxu0 0.0
    %266 = vmatprep.subr.mxu0 0.0
    %267 = vmatpush2.msra.mxu0 0.0
    %268 = vmatprep.subr.mxu0 0.0
    %269 = vmatpush2.msra.mxu0 0.0
    %270 = vmatprep.subr.mxu0 0.0
    %271 = vmatpush2.msra.mxu0 0.0
    %272 = vmatprep.subr.mxu0 0.0
    %273 = vmatpush2.msra.mxu0 0.0
    %274 = vmatprep.subr.mxu0 0.0
    %275 = vmatpush2.msra.mxu0 0.0
    %276 = vmatprep.subr.mxu0 0.0
    %277 = vmatpush2.msra.mxu0 0.0
    %278 = vmatprep.subr.mxu0 0.0
    %279 = vmatpush2.msra.mxu0 0.0
    %280 = vmatprep.subr.mxu0 0.0
    %281 = vmatpush2.msra.mxu0 0.0
    %282 = vmatprep.subr.mxu0 0.0
    %283 = vmatpush2.msra.mxu0 0.0
    %284 = vmatprep.subr.mxu0 0.0
    %285 = vmatpush2.msra.mxu0 0.0
    %286 = vmatprep.subr.mxu0 0.0
    %287 = vmatpush2.msra.mxu0 0.0
    %288 = vmatprep.subr.mxu0 0.0
    %289 = vmatpush2.msra.mxu0 0.0
    %290 = vmatprep.subr.mxu0 0.0
    %291 = vmatpush2.msra.mxu0 0.0
    %292 = vmatprep.subr.mxu0 0.0
    %293 = vmatpush2.msra.mxu0 0.0
    %294 = vmatprep.subr.mxu0 0.0
    %295 = vmatpush2.msra.mxu0 0.0
    %296 = vmatprep.mubr.f32.mxu0 0.0
    %297 = vmatmul.mubr.f32.gmra.mxu0 %v142
    %v298 = vpop.f32.mrf.mxu0
    %v299 = vadd.f32 0.0, %v298
    %v300 = vpop.f32.mrf.mxu0
    %301 = vdwg.mxu0
    %302 = vmatprep.subr.mxu0 0.0
    %303 = vmatpush1.msra.mxu0 0.0
    %304 = vmatprep.subr.mxu0 0.0
    %305 = vmatpush1.msra.mxu0 0.0
    %306 = vmatprep.subr.mxu0 0.0
    %307 = vmatpush1.msra.mxu0 0.0
    %308 = vmatprep.subr.mxu0 0.0
    %309 = vmatpush1.msra.mxu0 0.0
    %310 = vmatprep.subr.mxu0 0.0
    %311 = vmatpush1.msra.mxu0 0.0
    %312 = vmatprep.subr.mxu0 0.0
    %313 = vmatpush1.msra.mxu0 0.0
    %314 = vmatprep.subr.mxu0 0.0
    %315 = vmatpush1.msra.mxu0 0.0
    %316 = vmatprep.subr.mxu0 0.0
    %317 = vmatpush1.msra.mxu0 0.0
    %318 = vmatprep.subr.mxu0 0.0
    %319 = vmatpush1.msra.mxu0 %v223
    %320 = vmatprep.subr.mxu0 0.0
    %321 = vmatpush1.msra.mxu0 %v222
    %322 = vmatprep.subr.mxu0 0.0
    %323 = vmatpush1.msra.mxu0 %v221
    %324 = vmatprep.subr.mxu0 0.0
    %325 = vmatpush1.msra.mxu0 %v220
    %326 = vmatprep.subr.mxu0 0.0
    %327 = vmatpush1.msra.mxu0 %v219
    %328 = vmatprep.subr.mxu0 0.0
    %329 = vmatpush1.msra.mxu0 %v218
    %330 = vmatprep.subr.mxu0 0.0
    %331 = vmatpush1.msra.mxu0 %v217
    %332 = vmatprep.subr.mxu0 0.0
    %333 = vmatpush1.msra.mxu0 %v216
    %334 = vmatprep.subr.mxu0 0.0
    %335 = vmatpush2.msra.mxu0 0.0
    %336 = vmatprep.subr.mxu0 0.0
    %337 = vmatpush2.msra.mxu0 0.0
    %338 = vmatprep.subr.mxu0 0.0
    %339 = vmatpush2.msra.mxu0 0.0
    %340 = vmatprep.subr.mxu0 0.0
    %341 = vmatpush2.msra.mxu0 0.0
    %342 = vmatprep.subr.mxu0 0.0
    %343 = vmatpush2.msra.mxu0 0.0
    %344 = vmatprep.subr.mxu0 0.0
    %345 = vmatpush2.msra.mxu0 0.0
    %346 = vmatprep.subr.mxu0 0.0
    %347 = vmatpush2.msra.mxu0 0.0
    %348 = vmatprep.subr.mxu0 0.0
    %349 = vmatpush2.msra.mxu0 0.0
    %350 = vmatprep.subr.mxu0 0.0
    %351 = vmatpush2.msra.mxu0 0.0
    %352 = vmatprep.subr.mxu0 0.0
    %353 = vmatpush2.msra.mxu0 0.0
    %354 = vmatprep.subr.mxu0 0.0
    %355 = vmatpush2.msra.mxu0 0.0
    %356 = vmatprep.subr.mxu0 0.0
    %357 = vmatpush2.msra.mxu0 0.0
    %358 = vmatprep.subr.mxu0 0.0
    %359 = vmatpush2.msra.mxu0 0.0
    %360 = vmatprep.subr.mxu0 0.0
    %361 = vmatpush2.msra.mxu0 0.0
    %362 = vmatprep.subr.mxu0 0.0
    %363 = vmatpush2.msra.mxu0 0.0
    %364 = vmatprep.subr.mxu0 0.0
    %365 = vmatpush2.msra.mxu0 0.0
    %366 = vmatprep.mubr.f32.mxu0 0.0
    %367 = vmatmul.mubr.f32.gmra.mxu0 %v29
    %v368 = vpop.f32.mrf.mxu0
    %v369 = vadd.f32 %v299, %v368
    %v370 = vpop.f32.mrf.mxu0
    %371 = vdwg.mxu0
    %v372 = vrot.slane %v18, 2
    %v374 = vadd.f32 %v369, %v372
    %v375 = vmul.f32 %v374, 0.5
    %v376 = vmul.f32 %v374, 0.70710677
    %vm377 = vcmp.ge.f32.partialorder %v376, 0.0
    %v378 = vsel %vm377, 1.0, -1.0
    %v379 = vand.u32 2147483647, %v376
    %v380 = vmul.f32 %v379, 0.3275911
    %v381 = vadd.f32 %v380, 1.0
    %v382 = vrcp.pop %v381
    %v383 = vmul.f32 %v381, %v382
    %v384 = vsub.f32 2.0, %v383
    %v385 = vmul.f32 %v382, %v384
    %v386 = vmul.f32 %v385, 1.0614054
    %v387 = vadd.f32 %v386, -1.4531521
    %v388 = vmul.f32 %v387, %v385
    %v389 = vadd.f32 %v388, 1.4214138
    %v390 = vmul.f32 %v389, %v385
    %v391 = vadd.f32 %v390, -0.28449672
    %v392 = vmul.f32 %v391, %v385
    %v393 = vadd.f32 %v392, 0.2548296
    %v394 = vmul.f32 %v393, %v385
    %v395 = vsub.f32 0.0, %v379
    %v396 = vmul.f32 %v395, %v379
    %v397 = vmul.f32 %v396, 1.442695
    %v398 = vpow.pop %v397
    %v399 = vmul.f32 %v394, %v398
    %v400 = vsub.f32 1.0, %v399
    %v401 = vmul.f32 %v378, %v400
    %v402 = vadd.f32 %v401, 1.0
    %v403 = vmul.f32 %v375, %v402
    %v404 = vld [vmem:[%s1 + $0x100] sm:$0xff]
    %v405 = vld [vmem:[%s1 + $0x108] sm:$0xff]
    %v406 = vld [vmem:[%s1 + $0x110] sm:$0xff]
    %v407 = vld [vmem:[%s1 + $0x118] sm:$0xff]
    %v408 = vld [vmem:[%s1 + $0x120] sm:$0xff]
    %v409 = vld [vmem:[%s1 + $0x128] sm:$0xff]
    %v410 = vld [vmem:[%s1 + $0x130] sm:$0xff]
    %v411 = vld [vmem:[%s1 + $0x138] sm:$0xff]
    %v412 = vrot.slane %v18, 3
    %v415 = vsel %vm27, %v403, 0
    %417 = vmatprep.subr.mxu0 0.0
    %418 = vmatpush1.msra.mxu0 0.0
    %419 = vmatprep.subr.mxu0 0.0
    %420 = vmatpush1.msra.mxu0 0.0
    %421 = vmatprep.subr.mxu0 0.0
    %422 = vmatpush1.msra.mxu0 0.0
    %423 = vmatprep.subr.mxu0 0.0
    %424 = vmatpush1.msra.mxu0 0.0
    %425 = vmatprep.subr.mxu0 0.0
    %426 = vmatpush1.msra.mxu0 0.0
    %427 = vmatprep.subr.mxu0 0.0
    %428 = vmatpush1.msra.mxu0 0.0
    %429 = vmatprep.subr.mxu0 0.0
    %430 = vmatpush1.msra.mxu0 0.0
    %431 = vmatprep.subr.mxu0 0.0
    %432 = vmatpush1.msra.mxu0 0.0
    %433 = vmatprep.subr.mxu0 0.0
    %434 = vmatpush1.msra.mxu0 %v411
    %435 = vmatprep.subr.mxu0 0.0
    %436 = vmatpush1.msra.mxu0 %v410
    %437 = vmatprep.subr.mxu0 0.0
    %438 = vmatpush1.msra.mxu0 %v409
    %439 = vmatprep.subr.mxu0 0.0
    %440 = vmatpush1.msra.mxu0 %v408
    %441 = vmatprep.subr.mxu0 0.0
    %442 = vmatpush1.msra.mxu0 %v407
    %443 = vmatprep.subr.mxu0 0.0
    %444 = vmatpush1.msra.mxu0 %v406
    %445 = vmatprep.subr.mxu0 0.0
    %446 = vmatpush1.msra.mxu0 %v405
    %447 = vmatprep.subr.mxu0 0.0
    %448 = vmatpush1.msra.mxu0 %v404
    %449 = vmatprep.subr.mxu0 0.0
    %450 = vmatpush2.msra.mxu0 0.0
    %451 = vmatprep.subr.mxu0 0.0
    %452 = vmatpush2.msra.mxu0 0.0
    %453 = vmatprep.subr.mxu0 0.0
    %454 = vmatpush2.msra.mxu0 0.0
    %455 = vmatprep.subr.mxu0 0.0
    %456 = vmatpush2.msra.mxu0 0.0
    %457 = vmatprep.subr.mxu0 0.0
    %458 = vmatpush2.msra.mxu0 0.0
    %459 = vmatprep.subr.mxu0 0.0
    %460 = vmatpush2.msra.mxu0 0.0
    %461 = vmatprep.subr.mxu0 0.0
    %462 = vmatpush2.msra.mxu0 0.0
    %463 = vmatprep.subr.mxu0 0.0
    %464 = vmatpush2.msra.mxu0 0.0
    %465 = vmatprep.subr.mxu0 0.0
    %466 = vmatpush2.msra.mxu0 0.0
    %467 = vmatprep.subr.mxu0 0.0
    %468 = vmatpush2.msra.mxu0 0.0
    %469 = vmatprep.subr.mxu0 0.0
    %470 = vmatpush2.msra.mxu0 0.0
    %471 = vmatprep.subr.mxu0 0.0
    %472 = vmatpush2.msra.mxu0 0.0
    %473 = vmatprep.subr.mxu0 0.0
    %474 = vmatpush2.msra.mxu0 0.0
    %475 = vmatprep.subr.mxu0 0.0
    %476 = vmatpush2.msra.mxu0 0.0
    %477 = vmatprep.subr.mxu0 0.0
    %478 = vmatpush2.msra.mxu0 0.0
    %479 = vmatprep.subr.mxu0 0.0
    %480 = vmatpush2.msra.mxu0 0.0
    %481 = vmatprep.mubr.f32.mxu0 0.0
    %482 = vmatmul.mubr.f32.gmra.mxu0 %v415
    %v483 = vpop.f32.mrf.mxu0
    %v484 = vadd.f32 %v412, %v483
    %v485 = vpop.f32.mrf.mxu0
    %486 = vdwg.mxu0
    %vm487 = vcmask 122880
    %488 = vst.msk [vmem:[#allocation2] sm:$0x1] %vm487, %v484
    // Predicated region
    $region14: #{multi_gaussian_forward.1} parent=1 // pred_check
      _
    $region15: #{multi_gaussian_forward.1} parent=1 // pred_check_branch
      %490 = sbr.rel (0) target = $region17
    $region16: #{multi_gaussian_forward.1} parent=1 // pred_region
      _
    $region17: #{multi_gaussian_forward.1} parent=1 // pred_fallthru
      _
    // Predicated region
    $region18: #{multi_gaussian_forward.1} parent=1 // pred_check
      _
    $region19: #{multi_gaussian_forward.1} parent=1 // pred_check_branch
      %492 = sbr.rel (0) target = $region21
    $region20: #{multi_gaussian_forward.1} parent=1 // pred_region
      %s494 = ssub.s32 16, 16
      %495 = vsyncadd [#allocation3], %s494
      %s497 = sshll.u32 [#allocation2], 4
      %s498 = int_to_ptr.vmem [resolvable:$true] %s497
      %500 = dma.vmem_to_hbm [thread:$0]  %s498, 16, %s4, [#allocation3]
    $region21: #{multi_gaussian_forward.1} parent=1 // pred_fallthru
      _
    // Predicated region
    $region22: #{multi_gaussian_forward.1} parent=1 // pred_check
      _
    $region23: #{multi_gaussian_forward.1} parent=1 // pred_check_branch
      %502 = sbr.rel (0) target = $region25
    $region24: #{multi_gaussian_forward.1} parent=1 // pred_region
      _
    $region25: #{multi_gaussian_forward.1} parent=1 // pred_fallthru
      _
    // Predicated region
    $region26: #{multi_gaussian_forward.1} parent=1 // pred_check
      _
    $region27: #{multi_gaussian_forward.1} parent=1 // pred_check_branch
      %504 = sbr.rel (0) target = $region29
    $region28: #{multi_gaussian_forward.1} parent=1 // pred_region
      %505 = dma.done [#allocation3], 16
    $region29: #{multi_gaussian_forward.1} parent=1 // pred_fallthru
      _
    %506 = vsyncpa [#allocation3], 1

</llo_original>
